<compile_context>
chip_gen: v7x
topology: tpu7x:2x2x1
jax: 0.10.0
libtpu: 0.0.40
codegen_flags: <defaults>
</compile_context>

<pallas_src>
import functools

import jax
import jax.numpy as jnp
from jax.experimental import pallas as pl
from jax.experimental.pallas import tpu as pltpu

ALPHA = 1.0   # module default
GAMMA = 2.0   # module default

_TARGET_LOGITS_BLOCK_BYTES = 2 * 1024 * 1024   # ~2 MiB of logits per pipelined block


def _focal_bce_kernel(x_ref, t_ref, o_ref, acc_ref, *,
                      n_total, p_valid, use_mask, alpha, gamma):
    """x_ref: (C, R, 128) logits tile, t_ref: (R, 128) targets tile,
    o_ref: (1, 1) mean focal loss, acc_ref: (1, 1) f32 running sum."""
    n_i = pl.program_id(0)
    r_i = pl.program_id(1)

    @pl.when(jnp.logical_and(n_i == 0, r_i == 0))
    def _():
        acc_ref[...] = jnp.zeros_like(acc_ref)

    x = x_ref[...].astype(jnp.float32)        # (C, R, 128)
    t = t_ref[...].astype(jnp.float32)        # (R, 128)
    C = x.shape[0]

    if C == 2:
        # log-softmax for 2 classes: logZ - max(x0,x1) = log(1 + exp(-|x1-x0|))
        d = x[1] - x[0]                                   # (R, 128)
        softplus = jnp.log(1.0 + jnp.exp(-jnp.abs(d)))
        log_p = jnp.minimum(d, 0.0) - softplus            # log softmax(x)[1]
        log_1mp = jnp.minimum(-d, 0.0) - softplus         # log softmax(x)[0] = log(1 - p)
    else:
        # generic log-softmax; 1 - p1 = sum_{c != 1} softmax(x)[c]
        m = jnp.max(x, axis=0)                            # (R, 128)
        e = jnp.exp(x - m[None])                          # (C, R, 128)
        s = jnp.sum(e, axis=0)                            # (R, 128)
        log_s = jnp.log(s)
        log_p = (x[1] - m) - log_s
        log_1mp = jnp.log(s - e[1]) - log_s

    # PyTorch binary_cross_entropy clamps the log terms at -100
    log_p = jnp.maximum(log_p, -100.0)
    log_1mp = jnp.maximum(log_1mp, -100.0)

    bce = -(t * log_p + (1.0 - t) * log_1mp)              # (R, 128)
    pt = jnp.exp(-bce)
    one_m_pt = 1.0 - pt
    if gamma == 2.0:
        focal = one_m_pt * one_m_pt                        # explicit square: no float pow
    elif gamma == 1.0:
        focal = one_m_pt
    else:
        focal = one_m_pt ** gamma
    f = focal * bce
    if alpha != 1.0:
        f = alpha * f

    if use_mask:
        # mask out padded pixels (non-128-aligned P and/or ragged last row-tile)
        R = f.shape[0]
        row = jax.lax.broadcasted_iota(jnp.int32, (R, 128), 0)
        lane = jax.lax.broadcasted_iota(jnp.int32, (R, 128), 1)
        pix = (r_i * R + row) * 128 + lane
        f = jnp.where(pix < p_valid, f, 0.0)

    acc_ref[...] += jnp.sum(f, keepdims=True)              # (1, 1)

    @pl.when(jnp.logical_and(n_i == pl.num_programs(0) - 1,
                             r_i == pl.num_programs(1) - 1))
    def _():
        o_ref[...] = (acc_ref[...] / jnp.float32(n_total)).astype(o_ref.dtype)


def focal_loss_bce(inputs, targets, alpha=ALPHA, gamma=GAMMA):
    """inputs: (N, C, H, W) scores, targets: (N, H, W) in {0,1}.
    Returns scalar mean focal loss (logits=False, reduce=True)."""
    N, C, H, W = inputs.shape
    P = H * W
    n_total = N * P

    # Free reshapes only (no transpose, no dtype cast): NCHW -> (N, C, P), (N, P)
    x = inputs.reshape(N, C, P)
    t = targets.reshape(N, P)

    # Pad pixel axis to a multiple of 128 (only when needed); padded pixels are masked out.
    P_pad = ((P + 127) // 128) * 128
    if P_pad != P:
        x = jnp.pad(x, ((0, 0), (0, 0), (0, P_pad - P)))
        t = jnp.pad(t, ((0, 0), (0, P_pad - P)))
    RT = P_pad // 128
    x = x.reshape(N, C, RT, 128)     # free reshape: pixels sublane+lane dense
    t = t.reshape(N, RT, 128)

    # Row-tile sized for ~2 MiB of logits per block (multiple of 8, or full RT).
    bytes_per_row = C * 128 * x.dtype.itemsize
    rows_for_target = max(8, (_TARGET_LOGITS_BLOCK_BYTES // bytes_per_row) // 8 * 8)
    r_tile = min(rows_for_target, RT)
    n_r_tiles = pl.cdiv(RT, r_tile)

    use_mask = (P_pad != P) or (RT % r_tile != 0)

    kernel = functools.partial(
        _focal_bce_kernel,
        n_total=n_total, p_valid=P, use_mask=use_mask,
        alpha=float(alpha), gamma=float(gamma))

    out = pl.pallas_call(
        kernel,
        out_shape=jax.ShapeDtypeStruct((1, 1), jnp.float32),
        grid_spec=pltpu.PrefetchScalarGridSpec(
            num_scalar_prefetch=0,
            grid=(N, n_r_tiles),
            in_specs=[
                # logits: (C, r_tile, 128) per step, batch dim squeezed out
                pl.BlockSpec((pl.Squeezed(), C, r_tile, 128),
                             lambda n, r: (n, 0, r, 0)),
                # targets: (r_tile, 128) per step
                pl.BlockSpec((pl.Squeezed(), r_tile, 128),
                             lambda n, r: (n, r, 0)),
            ],
            out_specs=pl.BlockSpec((1, 1), lambda n, r: (0, 0)),   # resident scalar output
            scratch_shapes=[pltpu.VMEM((1, 1), jnp.float32)],
        ),
        compiler_params=pltpu.CompilerParams(
            dimension_semantics=("arbitrary", "arbitrary"),  # single running accumulator
        ),
    )(x, t)
    return out[0, 0]


if __name__ == "__main__":
    key = jax.random.PRNGKey(0)
    k1, k2 = jax.random.split(key)

    # small binary-segmentation-style shapes: NCHW logits (C=2), per-pixel {0,1} targets
    inputs = jax.random.normal(k1, (2, 2, 16, 16), dtype=jnp.float32)
    targets = (jax.random.uniform(k2, (2, 16, 16)) > 0.5).astype(jnp.float32)

    loss = focal_loss_bce(inputs, targets)
    loss = jax.block_until_ready(loss)

    # plain-JAX reference of the PyTorch math (sanity check)
    p = jax.nn.softmax(inputs, axis=1)[:, 1]
    bce = -(targets * jnp.maximum(jnp.log(p), -100.0)
            + (1.0 - targets) * jnp.maximum(jnp.log(1.0 - p), -100.0))
    pt = jnp.exp(-bce)
    ref = jnp.mean(ALPHA * (1.0 - pt) ** GAMMA * bce)
    assert jnp.allclose(loss, ref, atol=1e-5, rtol=1e-5), (loss, ref)

    print("KERNEL_OK")
</pallas_src>

<mosaic_0001>
module attributes {stable_mosaic.version = 11 : i64} {
  func.func @_focal_bce_kernel(%arg0: i32, %arg1: i32, %arg2: memref<1x2x2x128xf32, #tpu.memory_space<vmem>>, %arg3: memref<1x2x128xf32, #tpu.memory_space<vmem>>, %arg4: memref<1x1xf32, #tpu.memory_space<vmem>>, %arg5: memref<1x1xf32, #tpu.memory_space<vmem>>) attributes {dimension_semantics = [#tpu.dimension_semantics<arbitrary>, #tpu.dimension_semantics<arbitrary>], iteration_bounds = array<i64: 2, 1>, scalar_prefetch = 0 : i64, scratch_operands = 1 : i64, tpu.core_type = #tpu.core_type<tc>, window_params = [{transform_indices = @transform_0, window_bounds = array<i64: 1, 2, 2, 128>}, {transform_indices = @transform_1, window_bounds = array<i64: 1, 2, 128>}, {pipeline_mode = #tpu.pipeline_mode<synchronous>, transform_indices = @transform_2, window_bounds = array<i64: 1, 1>}]} {
    %c0_i32 = arith.constant 0 : i32
    %0 = arith.cmpi eq, %arg0, %c0_i32 : i32
    %c0_i32_0 = arith.constant 0 : i32
    %1 = arith.cmpi eq, %arg1, %c0_i32_0 : i32
    %2 = arith.andi %0, %1 : i1
    %3 = arith.extui %2 : i1 to i32
    %c0_i32_1 = arith.constant 0 : i32
    %4 = arith.cmpi ne, %3, %c0_i32_1 : i32
    scf.if %4 {
      %cst_25 = arith.constant 0.000000e+00 : f32
      %60 = vector.broadcast %cst_25 : f32 to vector<1x1xf32>
      %c0_26 = arith.constant 0 : index
      %c0_27 = arith.constant 0 : index
      %61 = vector.load %arg5[%c0_26, %c0_27] : memref<1x1xf32, #tpu.memory_space<vmem>>, vector<1x1xf32>
      tpu.vector_store %arg5[%c0_26, %c0_27], %60 {strides = array<i32>} : memref<1x1xf32, #tpu.memory_space<vmem>>, vector<1x1xf32>,
    } else {
    }
    %c0 = arith.constant 0 : index
    %c0_2 = arith.constant 0 : index
    %c0_3 = arith.constant 0 : index
    %c0_4 = arith.constant 0 : index
    %5 = vector.load %arg2[%c0, %c0_2, %c0_3, %c0_4] : memref<1x2x2x128xf32, #tpu.memory_space<vmem>>, vector<1x2x2x128xf32>
    %6 = vector.shape_cast %5 : vector<1x2x2x128xf32> to vector<2x2x128xf32>
    %c0_5 = arith.constant 0 : index
    %c0_6 = arith.constant 0 : index
    %c0_7 = arith.constant 0 : index
    %7 = vector.load %arg3[%c0_5, %c0_6, %c0_7] : memref<1x2x128xf32, #tpu.memory_space<vmem>>, vector<1x2x128xf32>
    %8 = vector.shape_cast %7 : vector<1x2x128xf32> to vector<2x128xf32>
    %9 = vector.extract_strided_slice %6 {offsets = [1, 0, 0], sizes = [1, 2, 128], strides = [1, 1, 1]} : vector<2x2x128xf32> to vector<1x2x128xf32>
    %10 = vector.shape_cast %9 : vector<1x2x128xf32> to vector<2x128xf32>
    %11 = vector.extract_strided_slice %6 {offsets = [0, 0, 0], sizes = [1, 2, 128], strides = [1, 1, 1]} : vector<2x2x128xf32> to vector<1x2x128xf32>
    %12 = vector.shape_cast %11 : vector<1x2x128xf32> to vector<2x128xf32>
    %13 = arith.subf %10, %12 : vector<2x128xf32>
    %14 = math.absf %13 : vector<2x128xf32>
    %cst = arith.constant 0.000000e+00 : f32
    %15 = vector.broadcast %cst : f32 to vector<2x128xf32>
    %16 = arith.subf %15, %14 : vector<2x128xf32>
    %17 = math.exp %16 : vector<2x128xf32>
    %cst_8 = arith.constant 1.000000e+00 : f32
    %18 = vector.broadcast %cst_8 : f32 to vector<2x128xf32>
    %19 = arith.addf %18, %17 : vector<2x128xf32>
    %20 = math.log %19 : vector<2x128xf32>
    %cst_9 = arith.constant 0.000000e+00 : f32
    %21 = vector.broadcast %cst_9 : f32 to vector<2x128xf32>
    %22 = arith.minimumf %13, %21 : vector<2x128xf32>
    %23 = arith.subf %22, %20 : vector<2x128xf32>
    %cst_10 = arith.constant 0.000000e+00 : f32
    %24 = vector.broadcast %cst_10 : f32 to vector<2x128xf32>
    %25 = arith.subf %24, %13 : vector<2x128xf32>
    %cst_11 = arith.constant 0.000000e+00 : f32
    %26 = vector.broadcast %cst_11 : f32 to vector<2x128xf32>
    %27 = arith.minimumf %25, %26 : vector<2x128xf32>
    %28 = arith.subf %27, %20 : vector<2x128xf32>
    %cst_12 = arith.constant -1.000000e+02 : f32
    %29 = vector.broadcast %cst_12 : f32 to vector<2x128xf32>
    %30 = arith.maximumf %23, %29 : vector<2x128xf32>
    %cst_13 = arith.constant -1.000000e+02 : f32
    %31 = vector.broadcast %cst_13 : f32 to vector<2x128xf32>
    %32 = arith.maximumf %28, %31 : vector<2x128xf32>
    %33 = arith.mulf %8, %30 : vector<2x128xf32>
    %cst_14 = arith.constant 1.000000e+00 : f32
    %34 = vector.broadcast %cst_14 : f32 to vector<2x128xf32>
    %35 = arith.subf %34, %8 : vector<2x128xf32>
    %36 = arith.mulf %35, %32 : vector<2x128xf32>
    %37 = arith.addf %33, %36 : vector<2x128xf32>
    %cst_15 = arith.constant 0.000000e+00 : f32
    %38 = vector.broadcast %cst_15 : f32 to vector<2x128xf32>
    %39 = arith.subf %38, %37 : vector<2x128xf32>
    %cst_16 = arith.constant 0.000000e+00 : f32
    %40 = vector.broadcast %cst_16 : f32 to vector<2x128xf32>
    %41 = arith.subf %40, %39 : vector<2x128xf32>
    %42 = math.exp %41 : vector<2x128xf32>
    %cst_17 = arith.constant 1.000000e+00 : f32
    %43 = vector.broadcast %cst_17 : f32 to vector<2x128xf32>
    %44 = arith.subf %43, %42 : vector<2x128xf32>
    %45 = arith.mulf %44, %44 : vector<2x128xf32>
    %46 = arith.mulf %45, %39 : vector<2x128xf32>
    %c0_18 = arith.constant 0 : index
    %c0_19 = arith.constant 0 : index
    %47 = vector.load %arg5[%c0_18, %c0_19] : memref<1x1xf32, #tpu.memory_space<vmem>>, vector<1x1xf32>
    %48 = vector.shape_cast %46 : vector<2x128xf32> to vector<1x2x128xf32>
    %cst_20 = arith.constant dense<0.000000e+00> : vector<1xf32>
    %49 = vector.multi_reduction <add>, %48, %cst_20 [1, 2] : vector<1x2x128xf32> to vector<1xf32>
    %50 = vector.shape_cast %49 : vector<1xf32> to vector<1x1x1xf32>
    %51 = vector.extract %50[0, 0, 0] : f32 from vector<1x1x1xf32>
    %52 = vector.broadcast %51 : f32 to vector<1x1xf32>
    %53 = arith.addf %47, %52 : vector<1x1xf32>
    %c0_21 = arith.constant 0 : index
    %c0_22 = arith.constant 0 : index
    %54 = vector.load %arg5[%c0_21, %c0_22] : memref<1x1xf32, #tpu.memory_space<vmem>>, vector<1x1xf32>
    tpu.vector_store %arg5[%c0_21, %c0_22], %53 {strides = array<i32>} : memref<1x1xf32, #tpu.memory_space<vmem>>, vector<1x1xf32>,
    %c1_i32 = arith.constant 1 : i32
    %55 = arith.cmpi eq, %arg0, %c1_i32 : i32
    %c0_i32_23 = arith.constant 0 : i32
    %56 = arith.cmpi eq, %arg1, %c0_i32_23 : i32
    %57 = arith.andi %55, %56 : i1
    %58 = arith.extui %57 : i1 to i32
    %c0_i32_24 = arith.constant 0 : i32
    %59 = arith.cmpi ne, %58, %c0_i32_24 : i32
    scf.if %59 {
      %c0_25 = arith.constant 0 : index
      %c0_26 = arith.constant 0 : index
      %60 = vector.load %arg5[%c0_25, %c0_26] : memref<1x1xf32, #tpu.memory_space<vmem>>, vector<1x1xf32>
      %cst_27 = arith.constant 5.120000e+02 : f32
      %61 = vector.broadcast %cst_27 : f32 to vector<1x1xf32>
      %62 = arith.divf %60, %61 : vector<1x1xf32>
      %c0_28 = arith.constant 0 : index
      %c0_29 = arith.constant 0 : index
      %63 = vector.load %arg4[%c0_28, %c0_29] : memref<1x1xf32, #tpu.memory_space<vmem>>, vector<1x1xf32>
      tpu.vector_store %arg4[%c0_28, %c0_29], %62 {strides = array<i32>} : memref<1x1xf32, #tpu.memory_space<vmem>>, vector<1x1xf32>,
    } else {
    }
    return
  }
  func.func @transform_0(%arg0: i32, %arg1: i32) -> (i32, i32, i32, i32) {
    %c0_i32 = arith.constant 0 : i32
    %c0_i32_0 = arith.constant 0 : i32
    %c0_i32_1 = arith.constant 0 : i32
    return %arg0, %c0_i32, %arg1, %c0_i32_0 : i32, i32, i32, i32
  }
  func.func @transform_1(%arg0: i32, %arg1: i32) -> (i32, i32, i32) {
    %c0_i32 = arith.constant 0 : i32
    %c0_i32_0 = arith.constant 0 : i32
    return %arg0, %arg1, %c0_i32 : i32, i32, i32
  }
  func.func @transform_2(%arg0: i32, %arg1: i32) -> (i32, i32) {
    %c0_i32 = arith.constant 0 : i32
    %c0_i32_0 = arith.constant 0 : i32
    %c0_i32_1 = arith.constant 0 : i32
    return %c0_i32, %c0_i32_0 : i32, i32
  }
}

</mosaic_0001>

<llo_original>
// kernel: tpu_custom_call.1
$region0: #{tpu_custom_call.1}
  #allocation0 [shape = 'u32[]', space=smem, size = 0x4, offset = 0x4, fixed_abs, tag = 'smem constant byte address 0x4 - core index']
  #allocation1 [shape = 'u32[144,128]{1,0:T(1,128)}', space=vmem, size = 0x12000, scoped, tag = 'internal scratch']
  #allocation2 [shape = 'f32[1,1]{1,0:T(1,128)}', space=vmem, size = 0x200, scoped, tag = 'scratch operand']
  %s0 = inlined_call_operand.hbm [shape: f32[2,2,2,128], index: 0, kind: input, shape index: {}]
  %s1 = inlined_call_operand.hbm [shape: f32[2,2,128], index: 1, kind: input, shape index: {}]
  %s2 = inlined_call_operand.hbm [shape: f32[1,1], index: 2, kind: output, shape index: {}]
  %s3 = sld [smem:[#allocation0]]
  $region57: #{tpu_custom_call.1} parent=0
    _
  %s5 = ssub.s32 1, %s3
  %s6 = scalar_select 0, %s5, %s3
  $region1: #{tpu_custom_call.1} parent=0
    #allocation3 [shape = 'u8[4096]{0}', space=vmem, size = 0x1000, scoped, tag = 'input window, operand 0']
    #allocation4 [shape = 's32[2]{0}', space=sflag, size = 0x8, scoped, tag = 'scoped memory for tpu_custom_call.1']
    #allocation5 [shape = 's32[2]{0}', space=sflag, size = 0x8, scoped, tag = 'scoped memory for tpu_custom_call.1']
    #allocation6 [shape = 'u8[2048]{0}', space=vmem, size = 0x800, scoped, tag = 'input window, operand 1']
    #allocation7 [shape = 's32[2]{0}', space=sflag, size = 0x8, scoped, tag = 'scoped memory for tpu_custom_call.1']
    #allocation8 [shape = 'u8[512]{0}', space=vmem, size = 0x400, scoped, tag = 'output window, operand 0, single buffered']
    %7 = vsyncpa [#allocation4], 0
    %s8 = scalar_lea.sflag [#allocation4], 1
    %9 = vsyncpa %s8, 0
    %10 = vsyncpa [#allocation7], 0
    %s11 = scalar_lea.sflag [#allocation7], 1
    %12 = vsyncpa %s11, 0
    %13 = vsyncpa [#allocation5], 0
    loop: start=0, step=1, limit=4
    $region2: #{tpu_custom_call.1} parent=1 // loop_pre_header
      _
    $region3: #{tpu_custom_call.1} parent=1 // loop_header
      %s15 = sphi 0, %s19
      %p16 = scmp.ge.s32.totalorder %s15, 4
      %s22 = sphi 0, %s34
      %s23 = sphi 0, %s30
      %s24 = sphi 0, %s22
      %s25 = sphi 0, %s23
      %s26 = sphi 0, %s24
      %s27 = sphi 0, %s25
      %s39 = sphi 0, %s41
      %s42 = sphi 0, %s39
      %s43 = sphi 0, %s42
      %s59 = sphi 0, %s43
      %s67 = sphi 0, %s69
      %s70 = sphi 0, %s67
      %s71 = sphi 0, %s70
      %s87 = sphi 0, %s71
      %s91 = sphi 0, %s91
      %s93 = sphi 0, %s91
      %s94 = sphi 0, %s93
      %s108 = sphi 0, %s94
    $region4: #{tpu_custom_call.1} parent=1 // loop_header_branch
      %18 = sbr.rel (%p16) target = $region8
    $region5: #{tpu_custom_call.1} parent=1 // loop_body
      %s20 = ssub.s32 %s15, 1
      %s21 = ssub.s32 %s15, 2
      %s28 = sadd.s32 1, %s23
      %p29 = scmp.ge.s32.totalorder %s28, 1
      %s30 = scalar_select %p29, 0, %s28
      %s31 = sadd.s32 1, %s22
      %s32 = scalar_select %p29, %s31, %s22
      %p33 = scmp.ge.s32.totalorder %s32, 2
      %s34 = scalar_select %p33, 0, %s32
      %s35 = ssub.s32 %s22, %s34
      %s36 = ssub.s32 %s23, %s30
      %s37 = sor.u32 %s35, %s36
      %p38 = scmp.eq.s32.totalorder %s37, 0
      %s40 = sadd.s32 %s39, 1
      %s41 = scalar_select %p38, %s39, %s40
      %p44 = pneg %p38
      %p45 = scmp.eq.s32.totalorder %s15, 1
      %p46 = por %p44, %p45
      %p47 = scmp.ne.s32.totalorder %s39, %s42
      %p48 = scmp.eq.s32.totalorder %s15, 0
      %p49 = por %p47, %p48
      %p50 = scmp.ne.s32.totalorder %s39, %s42
      %p51 = scmp.eq.s32.totalorder %s20, 1
      %p52 = por %p50, %p51
      %p53 = scmp.ne.s32.totalorder %s42, %s43
      %p54 = scmp.eq.s32.totalorder %s20, 0
      %p55 = por %p53, %p54
      %p56 = scmp.ne.s32.totalorder %s42, %s43
      %p57 = scmp.eq.s32.totalorder %s21, 1
      %p58 = por %p56, %p57
      %p60 = scmp.ne.s32.totalorder %s43, %s59
      %p61 = scmp.eq.s32.totalorder %s21, 0
      %p62 = por %p60, %p61
      %s63 = ssub.s32 %s22, %s34
      %s64 = ssub.s32 %s23, %s30
      %s65 = sor.u32 %s63, %s64
      %p66 = scmp.eq.s32.totalorder %s65, 0
      %s68 = sadd.s32 %s67, 1
      %s69 = scalar_select %p66, %s67, %s68
      %p72 = pneg %p66
      %p73 = scmp.eq.s32.totalorder %s15, 1
      %p74 = por %p72, %p73
      %p75 = scmp.ne.s32.totalorder %s67, %s70
      %p76 = scmp.eq.s32.totalorder %s15, 0
      %p77 = por %p75, %p76
      %p78 = scmp.ne.s32.totalorder %s67, %s70
      %p79 = scmp.eq.s32.totalorder %s20, 1
      %p80 = por %p78, %p79
      %p81 = scmp.ne.s32.totalorder %s70, %s71
      %p82 = scmp.eq.s32.totalorder %s20, 0
      %p83 = por %p81, %p82
      %p84 = scmp.ne.s32.totalorder %s70, %s71
      %p85 = scmp.eq.s32.totalorder %s21, 1
      %p86 = por %p84, %p85
      %p88 = scmp.ne.s32.totalorder %s71, %s87
      %p89 = scmp.eq.s32.totalorder %s21, 0
      %p90 = por %p88, %p89
      %s92 = sadd.s32 %s91, 1
      %p95 = scmp.eq.s32.totalorder %s15, 1
      %p96 = scmp.ne.s32.totalorder %s91, %s93
      %p97 = scmp.eq.s32.totalorder %s15, 0
      %p98 = por %p96, %p97
      %p99 = scmp.ne.s32.totalorder %s91, %s93
      %p100 = scmp.eq.s32.totalorder %s20, 1
      %p101 = por %p99, %p100
      %p102 = scmp.ne.s32.totalorder %s93, %s94
      %p103 = scmp.eq.s32.totalorder %s20, 0
      %p104 = por %p102, %p103
      %p105 = scmp.ne.s32.totalorder %s93, %s94
      %p106 = scmp.eq.s32.totalorder %s21, 1
      %p107 = por %p105, %p106
      %p109 = scmp.ne.s32.totalorder %s94, %s108
      %p110 = scmp.eq.s32.totalorder %s21, 0
      %p111 = por %p109, %p110
      %p112 = scmp.le.s32.totalorder 1, %s15
      %p113 = scmp.lt.s32.totalorder %s15, 3
      %p114 = pnand %p112, %p113
      %p115 = pneg %p114
      // Predicated region
      $region9: #{tpu_custom_call.1} parent=5 // pred_check
        _
      $region10: #{tpu_custom_call.1} parent=5 // pred_check_branch
        %117 = sbr.rel (%p114) target = $region12
      $region11: #{tpu_custom_call.1} parent=5 // pred_region
        %s118 = ssub.s32 %s15, 1
      $region12: #{tpu_custom_call.1} parent=5 // pred_fallthru
        _
      %p119 = scmp.lt.s32.totalorder %s15, 2
      // Predicated region
      $region13: #{tpu_custom_call.1} parent=5 // pred_check
        %p120 = pneg %p119
      $region14: #{tpu_custom_call.1} parent=5 // pred_check_branch
        %122 = sbr.rel (%p120) target = $region16
      $region15: #{tpu_custom_call.1} parent=5 // pred_region
        // Predicated region
        $region17: #{tpu_custom_call.1} parent=15 // pred_check
          %p123 = pneg %p49
        $region18: #{tpu_custom_call.1} parent=15 // pred_check_branch
          %125 = sbr.rel (%p123) target = $region20
        $region19: #{tpu_custom_call.1} parent=15 // pred_region
          %s126 = sand.u32 %s39, 1
          %s127 = scalar_lea.sflag [#allocation4], %s126
          %s128 = sand.u32 %s39, 1
          %s129 = smul.addr %s128, 4
          %s130 = scalar_lea.vmem [#allocation3], %s129
          %s132 = ssub.s32 64, 64
          %133 = vsyncadd %s127, %s132
          %s134 = smul.addr %s22, 2
          %s135 = sadd.s32 %s23, %s134
          %s136 = smul.addr %s135, 32
          %s137 = scalar_lea.hbm %s0, %s136
          %s138 = sshll.u32 %s130, 4
          %s139 = int_to_ptr.vmem [resolvable:$true] %s138
          %144 = dma.hbm_to_vmem [thread:$0]  %s137, 64, %s139, %s127, 32, 32, 2
        $region20: #{tpu_custom_call.1} parent=15 // pred_fallthru
          _
        // Predicated region
        $region21: #{tpu_custom_call.1} parent=15 // pred_check
          %p145 = pneg %p77
        $region22: #{tpu_custom_call.1} parent=15 // pred_check_branch
          %147 = sbr.rel (%p145) target = $region24
        $region23: #{tpu_custom_call.1} parent=15 // pred_region
          %s148 = sand.u32 %s67, 1
          %s149 = scalar_lea.sflag [#allocation7], %s148
          %s150 = sand.u32 %s67, 1
          %s151 = smul.addr %s150, 2
          %s152 = scalar_lea.vmem [#allocation6], %s151
          %s154 = ssub.s32 32, 32
          %155 = vsyncadd %s149, %s154
          %s156 = sadd.s32 %s23, %s22
          %s157 = smul.addr %s156, 32
          %s158 = scalar_lea.hbm %s1, %s157
          %s160 = sshll.u32 %s152, 4
          %s161 = int_to_ptr.vmem [resolvable:$true] %s160
          %163 = dma.hbm_to_vmem [thread:$0]  %s158, 32, %s161, %s149
        $region24: #{tpu_custom_call.1} parent=15 // pred_fallthru
          _
      $region16: #{tpu_custom_call.1} parent=5 // pred_fallthru
        _
      %p164 = scmp.le.s32.totalorder 1, %s15
      %p165 = scmp.lt.s32.totalorder %s15, 3
      %p166 = pnand %p164, %p165
      %p167 = pneg %p166
      // Predicated region
      $region25: #{tpu_custom_call.1} parent=5 // pred_check
        _
      $region26: #{tpu_custom_call.1} parent=5 // pred_check_branch
        %169 = sbr.rel (%p166) target = $region28
      $region27: #{tpu_custom_call.1} parent=5 // pred_region
        %s170 = ssub.s32 %s15, 1
        %s171 = sand.u32 %s42, 1
        %s172 = scalar_lea.sflag [#allocation4], %s171
        %s173 = sand.u32 %s42, 1
        %s174 = smul.addr %s173, 4
        %s175 = scalar_lea.vmem [#allocation3], %s174
        // Predicated region
        $region29: #{tpu_custom_call.1} parent=27 // pred_check
          %p176 = pneg %p55
        $region30: #{tpu_custom_call.1} parent=27 // pred_check_branch
          %178 = sbr.rel (%p176) target = $region32
        $region31: #{tpu_custom_call.1} parent=27 // pred_region
          %179 = dma.done %s172, 64
        $region32: #{tpu_custom_call.1} parent=27 // pred_fallthru
          _
        %s180 = sand.u32 %s70, 1
        %s181 = scalar_lea.sflag [#allocation7], %s180
        %s182 = sand.u32 %s70, 1
        %s183 = smul.addr %s182, 2
        %s184 = scalar_lea.vmem [#allocation6], %s183
        // Predicated region
        $region33: #{tpu_custom_call.1} parent=27 // pred_check
          %p185 = pneg %p83
        $region34: #{tpu_custom_call.1} parent=27 // pred_check_branch
          %187 = sbr.rel (%p185) target = $region36
        $region35: #{tpu_custom_call.1} parent=27 // pred_region
          %188 = dma.done %s181, 32
        $region36: #{tpu_custom_call.1} parent=27 // pred_fallthru
          _
        %s189 = sand.u32 %s42, 1
        %s190 = scalar_lea.sflag [#allocation4], %s189
        %s191 = sand.u32 %s42, 1
        %s192 = smul.addr %s191, 4
        %s193 = scalar_lea.vmem [#allocation3], %s192
        %p194 = pneg %p55
        %p195 = pneg %p52
        %s196 = sand.u32 %s70, 1
        %s197 = scalar_lea.sflag [#allocation7], %s196
        %s198 = sand.u32 %s70, 1
        %s199 = smul.addr %s198, 2
        %s200 = scalar_lea.vmem [#allocation6], %s199
        %p201 = pneg %p83
        %p202 = pneg %p80
        %p203 = pneg %p104
        %p204 = pneg %p101
        %p205 = scmp.eq.s32.totalorder %s24, 0
        %p206 = scmp.eq.s32.totalorder %s25, 0
        %p207 = pnand %p205, %p206
        %p208 = pneg %p207
        // Predicated region
        $region37: #{tpu_custom_call.1} parent=27 // pred_check
          _
        $region38: #{tpu_custom_call.1} parent=27 // pred_check_branch
          %210 = sbr.rel (%p207) target = $region40
        $region39: #{tpu_custom_call.1} parent=27 // pred_region
          %vm211 = vcmask 0
          %212 = vst.msk [vmem:[#allocation2] sm:$0x1] %vm211, 0.0
        $region40: #{tpu_custom_call.1} parent=27 // pred_fallthru
          _
        %v213 = vld [vmem:[%s175] sm:$0x3]
        %v214 = vld [vmem:[%s175 + $0x2] sm:$0x3]
        %v215 = vld [vmem:[%s184] sm:$0x3]
        %v216 = vsub.f32 %v214, %v213
        %v217 = vand.u32 2147483647, %v216
        %v218 = vsub.f32 0.0, %v217
        %v219 = vmul.f32 %v218, 1.442695
        %v220 = vpow.pop %v219
        %v221 = vadd.f32 %v220, 1.0
        %v222 = vlog2.pop %v221
        %v223 = vmul.f32 %v222, 0.6931472
        %v224 = vmin.f32 %v216, 0.0
        %v225 = vsub.f32 %v224, %v223
        %v226 = vsub.f32 0.0, %v216
        %v227 = vmin.f32 %v226, 0.0
        %v228 = vsub.f32 %v227, %v223
        %v229 = vmax.f32 %v225, -100.0
        %v230 = vmax.f32 %v228, -100.0
        %v231 = vmul.f32 %v215, %v229
        %v232 = vsub.f32 1.0, %v215
        %v233 = vmul.f32 %v232, %v230
        %v234 = vadd.f32 %v231, %v233
        %v235 = vsub.f32 0.0, %v234
        %v236 = vsub.f32 0.0, %v235
        %v237 = vmul.f32 %v236, 1.442695
        %v238 = vpow.pop %v237
        %v239 = vsub.f32 1.0, %v238
        %v240 = vmul.f32 %v239, %v239
        %v241 = vmul.f32 %v240, %v235
        %v242 = vld [vmem:[#allocation2] sm:$0x1]
        %vm243 = vcmask 1041408
        %v244 = vsel %vm243, %v241, 0.0
        %245 = vadd.xlane.f32.xlu0 %v244
        %v246 = vpop.xlane.xlu0 %245
        %v247 = vrot.slane %v246, 4
        %v248 = vadd.f32 %v246, %v247
        %v249 = vrot.slane %v248, 2
        %v250 = vadd.f32 %v248, %v249
        %v251 = vrot.slane %v250, 1
        %v252 = vadd.f32 %v250, %v251
        %s253 = vtos %v252
        %v254 = vstv %s253
        %v255 = vadd.f32 %v242, %v254
        %vm256 = vcmask 0
        %257 = vst.msk [vmem:[#allocation2] sm:$0x1] %vm256, %v255
        %p258 = scmp.eq.s32.totalorder %s24, 1
        %p259 = pnand %p258, %p206
        %p260 = pneg %p259
        // Predicated region
        $region41: #{tpu_custom_call.1} parent=27 // pred_check
          _
        $region42: #{tpu_custom_call.1} parent=27 // pred_check_branch
          %262 = sbr.rel (%p259) target = $region44
        $region43: #{tpu_custom_call.1} parent=27 // pred_region
          %v263 = vld [vmem:[#allocation2] sm:$0x1]
          %v264 = vrcp.pop 512.0
          %v265 = vmul.f32 %v263, %v264
          %266 = vst.msk [vmem:[#allocation8] sm:$0x1] %vm256, %v265
        $region44: #{tpu_custom_call.1} parent=27 // pred_fallthru
          _
        // Predicated region
        $region45: #{tpu_custom_call.1} parent=27 // pred_check
          %p267 = pneg %p101
        $region46: #{tpu_custom_call.1} parent=27 // pred_check_branch
          %269 = sbr.rel (%p267) target = $region48
        $region47: #{tpu_custom_call.1} parent=27 // pred_region
          %s271 = ssub.s32 16, 16
          %272 = vsyncadd [#allocation5], %s271
          %s274 = sshll.u32 [#allocation8], 4
          %s275 = int_to_ptr.vmem [resolvable:$true] %s274
          %277 = dma.vmem_to_hbm [thread:$0]  %s275, 16, %s2, [#allocation5]
        $region48: #{tpu_custom_call.1} parent=27 // pred_fallthru
          _
        // Predicated region
        $region49: #{tpu_custom_call.1} parent=27 // pred_check
          %p278 = pneg %p101
        $region50: #{tpu_custom_call.1} parent=27 // pred_check_branch
          %280 = sbr.rel (%p278) target = $region52
        $region51: #{tpu_custom_call.1} parent=27 // pred_region
          %281 = dma.done [#allocation5], 16
        $region52: #{tpu_custom_call.1} parent=27 // pred_fallthru
          _
      $region28: #{tpu_custom_call.1} parent=5 // pred_fallthru
        _
      %p282 = scmp.le.s32.totalorder 2, %s15
      // Predicated region
      $region53: #{tpu_custom_call.1} parent=5 // pred_check
        %p283 = pneg %p282
      $region54: #{tpu_custom_call.1} parent=5 // pred_check_branch
        %285 = sbr.rel (%p283) target = $region56
      $region55: #{tpu_custom_call.1} parent=5 // pred_region
        %s286 = ssub.s32 %s15, 2
      $region56: #{tpu_custom_call.1} parent=5 // pred_fallthru
        _
    $region6: #{tpu_custom_call.1} parent=1 // loop_footer
      %s19 = sadd.s32 1, %s15
    $region7: #{tpu_custom_call.1} parent=1 // loop_footer_branch
      %14 = sbr.rel target = $region3
    $region8: #{tpu_custom_call.1} parent=1 // loop_exit
      _
    %287 = vsyncpa [#allocation4], 1
    %s288 = scalar_lea.sflag [#allocation4], 1
    %289 = vsyncpa %s288, 1
    %290 = vsyncpa [#allocation7], 1
    %s291 = scalar_lea.sflag [#allocation7], 1
    %292 = vsyncpa %s291, 1
    %293 = vsyncpa [#allocation5], 1
    %s294 = scalar_lea.sflag [#allocation5], 1
    %295 = vsyncpa %s294, 1

</llo_original>
